<compile_context>
chip_gen: v5e
topology: v5e:2x2
jax: 0.10.0
libtpu: 0.0.40
codegen_flags: <defaults>
</compile_context>

<pallas_src>
import functools

import jax
import jax.numpy as jnp
from jax import lax
from jax.experimental import pallas as pl
from jax.experimental.pallas import tpu as pltpu

N_QUBITS = 4
N_LAYERS = 3
BATCH = 2
DIM = 2 ** N_QUBITS          # 16
RDIM = 2 * DIM               # 32  (real embedding: [re | im])


# ----------------------------------------------------------------------------
# Host-side (glue): build the composed per-pass circuit matrix from the params.
# ----------------------------------------------------------------------------
def _ry(theta):
    c = jnp.cos(theta / 2).astype(jnp.complex64)
    s = jnp.sin(theta / 2).astype(jnp.complex64)
    return jnp.array([[c, -s], [s, c]], dtype=jnp.complex64)


def _rz(phi):
    em = jnp.exp(-1j * phi.astype(jnp.complex64) / 2)
    ep = jnp.exp(1j * phi.astype(jnp.complex64) / 2)
    zero = jnp.zeros((), jnp.complex64)
    return jnp.array([[em, zero], [zero, ep]], dtype=jnp.complex64)


def _cnot_full(n, control, target):
    """Full 2^n x 2^n CNOT matrix.  Qubit 0 is the most-significant bit."""
    dim = 2 ** n
    idx = jnp.arange(dim)
    cbit = (idx >> (n - 1 - control)) & 1
    new_idx = jnp.where(cbit == 1, idx ^ (1 << (n - 1 - target)), idx)
    return jax.nn.one_hot(new_idx, dim, dtype=jnp.complex64).T  # U[new, old] = 1


def _layer_unitary(layer_params, n):
    """One variational layer: per-qubit RZ(phi)@RY(theta), then CNOT ring."""
    thetas = layer_params[:n]
    phis = layer_params[n:]
    gates = [_rz(phis[q]) @ _ry(thetas[q]) for q in range(n)]
    single = functools.reduce(jnp.kron, gates)  # qubit 0 = MSB
    u = single
    for q in range(n):
        u = _cnot_full(n, q, (q + 1) % n) @ u
    return u


def build_pass_matrix(params):
    """Compose layers 0..L-1 into one real-embedded (32,32) matrix.

    Column-vector circuit:  s' = U_{L-1} ... U_1 U_0 s
    Row-vector kernel:      s_row' = s_row @ Upass^T
    Real embedding:         [re', im'] = [re, im] @ [[Mr, Mi], [-Mi, Mr]],  M = Upass^T
    """
    us = [_layer_unitary(params[l], N_QUBITS) for l in range(N_LAYERS)]
    upass = functools.reduce(lambda acc, u: u @ acc, us,
                             jnp.eye(DIM, dtype=jnp.complex64))
    m = upass.T
    mr = jnp.real(m).astype(jnp.float32)
    mi = jnp.imag(m).astype(jnp.float32)
    return jnp.block([[mr, mi], [-mi, mr]])  # (32, 32) float32


def build_zsign():
    """zsign[basis, q] = +1 if bit q of basis == 0 else -1 (qubit 0 = MSB)."""
    basis = jnp.arange(DIM)[:, None]
    q = jnp.arange(N_QUBITS)[None, :]
    bits = (basis >> (N_QUBITS - 1 - q)) & 1
    return (1.0 - 2.0 * bits).astype(jnp.float32)  # (16, 4)


# ----------------------------------------------------------------------------
# Pallas kernel: single invocation, batch loop unrolled, 2N-real statevector.
# ----------------------------------------------------------------------------
def qnn_kernel(m_ref, zsign_ref, out_ref, *, batch):
    m = m_ref[...]          # (32, 32) composed real-embedded per-pass matrix
    zs = zsign_ref[...]     # (32, 4)  duplicated Z-sign matrix ([zsign; zsign])

    # |0...0>  ->  re = e_0, im = 0   (lane 0 of the [re | im] row is 1)
    basis = lax.broadcasted_iota(jnp.int32, (1, RDIM), 1)
    state = (basis == 0).astype(jnp.float32)

    # Stateful semantics of the reference module: the circuit is NOT reset
    # between batch elements, so batch b sees (b+1) passes of the L layers.
    sq_rows = []
    for _ in range(batch):
        state = jnp.dot(state, m, preferred_element_type=jnp.float32)
        sq_rows.append(state * state)           # re^2 | im^2  -> probabilities

    sq = jnp.concatenate(sq_rows, axis=0)       # (batch, 32)
    # meas[b, q] = sum_k (re_k^2 + im_k^2) * zsign[k, q]; single dense store.
    out_ref[...] = jnp.dot(sq, zs, preferred_element_type=jnp.float32)


def quantum_neural_network(x, params):
    """x: (batch, n_qubits) float32 (only batch dim is used, per the reference).
    Returns (batch, n_qubits) float32 of Z expectations."""
    batch = x.shape[0]
    m_real = build_pass_matrix(params)                       # (32, 32)
    zsign2 = jnp.concatenate([build_zsign()] * 2, axis=0)    # (32, 4)

    return pl.pallas_call(
        functools.partial(qnn_kernel, batch=batch),
        out_shape=jax.ShapeDtypeStruct((batch, N_QUBITS), jnp.float32),
        # No grid: everything (a few KiB) lives in VMEM for one invocation.
        in_specs=[
            pl.BlockSpec(memory_space=pltpu.MemorySpace.VMEM),
            pl.BlockSpec(memory_space=pltpu.MemorySpace.VMEM),
        ],
        out_specs=pl.BlockSpec(memory_space=pltpu.MemorySpace.VMEM),
    )(m_real, zsign2)


# ----------------------------------------------------------------------------
# Pure-JAX reference (layer-by-layer, column-vector, complex) for a silent
# correctness check of the host-side composition + real embedding + kernel.
# ----------------------------------------------------------------------------
def reference(x, params):
    us = [_layer_unitary(params[l], N_QUBITS) for l in range(N_LAYERS)]
    zsign = build_zsign()
    state = jnp.zeros((DIM,), jnp.complex64).at[0].set(1.0)
    outs = []
    for _ in range(x.shape[0]):
        for l in range(N_LAYERS):
            state = us[l] @ state
        probs = jnp.abs(state) ** 2
        outs.append(probs @ zsign)
    return jnp.stack(outs).astype(jnp.float32)


if __name__ == "__main__":
    key = jax.random.PRNGKey(0)
    kx, kp = jax.random.split(key)
    x = jax.random.normal(kx, (BATCH, N_QUBITS), dtype=jnp.float32)
    # nn.Parameter(torch.randn(n_layers, 2 * n_qubits)) -> deterministic normal init
    params = jax.random.normal(kp, (N_LAYERS, 2 * N_QUBITS), dtype=jnp.float32)

    out = quantum_neural_network(x, params)
    out = jax.block_until_ready(out)

    ref = reference(x, params)
    assert out.shape == (BATCH, N_QUBITS)
    assert jnp.allclose(out, ref, rtol=1e-4, atol=1e-5)
    print("KERNEL_OK")
</pallas_src>

<mosaic_0001>
module attributes {stable_mosaic.version = 11 : i64} {
  func.func @qnn_kernel(%arg0: memref<32x32xf32, #tpu.memory_space<vmem>>, %arg1: memref<32x4xf32, #tpu.memory_space<vmem>>, %arg2: memref<2x4xf32, #tpu.memory_space<vmem>>) attributes {dimension_semantics = [], scalar_prefetch = 0 : i64, scratch_operands = 0 : i64, tpu.core_type = #tpu.core_type<tc>} {
    %c0 = arith.constant 0 : index
    %c0_0 = arith.constant 0 : index
    %0 = vector.load %arg0[%c0, %c0_0] : memref<32x32xf32, #tpu.memory_space<vmem>>, vector<32x32xf32>
    %c0_1 = arith.constant 0 : index
    %c0_2 = arith.constant 0 : index
    %1 = vector.load %arg1[%c0_1, %c0_2] : memref<32x4xf32, #tpu.memory_space<vmem>>, vector<32x4xf32>
    %2 = tpu.iota {dimensions = array<i32: 1>} : vector<1x32xi32>
    %c0_i32 = arith.constant 0 : i32
    %3 = vector.broadcast %c0_i32 : i32 to vector<1x32xi32>
    %4 = arith.cmpi eq, %2, %3 : vector<1x32xi32>
    %5 = arith.extui %4 : vector<1x32xi1> to vector<1x32xi32>
    %6 = arith.sitofp %5 : vector<1x32xi32> to vector<1x32xf32>
    %cst = arith.constant dense<0.000000e+00> : vector<1x32xf32>
    %7 = tpu.matmul %6, %0, %cst {dimension_numbers = #tpu.dot_dimension_numbers<[1], [0], [0], [1], [0, 0, 1, 1], [], []>} : vector<1x32xf32>, vector<32x32xf32>, vector<1x32xf32> -> vector<1x32xf32>
    %8 = arith.mulf %7, %7 : vector<1x32xf32>
    %cst_3 = arith.constant dense<0.000000e+00> : vector<1x32xf32>
    %9 = tpu.matmul %7, %0, %cst_3 {dimension_numbers = #tpu.dot_dimension_numbers<[1], [0], [0], [1], [0, 0, 1, 1], [], []>} : vector<1x32xf32>, vector<32x32xf32>, vector<1x32xf32> -> vector<1x32xf32>
    %10 = arith.mulf %9, %9 : vector<1x32xf32>
    %11 = tpu.concatenate %8, %10 in 0 : vector<1x32xf32>, vector<1x32xf32> -> vector<2x32xf32>
    %cst_4 = arith.constant dense<0.000000e+00> : vector<2x4xf32>
    %12 = tpu.matmul %11, %1, %cst_4 {dimension_numbers = #tpu.dot_dimension_numbers<[1], [0], [0], [1], [0, 0, 1, 1], [], []>} : vector<2x32xf32>, vector<32x4xf32>, vector<2x4xf32> -> vector<2x4xf32>
    %c0_5 = arith.constant 0 : index
    %c0_6 = arith.constant 0 : index
    %13 = vector.load %arg2[%c0_5, %c0_6] : memref<2x4xf32, #tpu.memory_space<vmem>>, vector<2x4xf32>
    tpu.vector_store %arg2[%c0_5, %c0_6], %12 {strides = array<i32>} : memref<2x4xf32, #tpu.memory_space<vmem>>, vector<2x4xf32>,
    return
  }
}

</mosaic_0001>

<llo_original>
// kernel: tpu_custom_call.1
$region0: #{tpu_custom_call.1}
  #allocation0 [shape = 'u32[]', space=smem, size = 0x4, offset = 0x4, fixed_abs, tag = 'smem constant byte address 0x4 - core index']
  #allocation1 [shape = 'u32[72,128]{1,0:T(1,128)}', space=vmem, size = 0x9000, scoped, tag = 'internal scratch']
  %s0 = inlined_call_operand.vmem [shape: f32[32,32], index: 0, kind: input, shape index: {}]
  %s1 = inlined_call_operand.vmem [shape: f32[32,4], index: 1, kind: input, shape index: {}]
  %s2 = inlined_call_operand.hbm [shape: f32[2,4], index: 2, kind: output, shape index: {}]
  %s3 = sld [smem:[#allocation0]]
  $region18: #{tpu_custom_call.1} parent=0
    _
  %s5 = ssub.s32 1, %s3
  %s6 = scalar_select 0, %s5, %s3
  $region1: #{tpu_custom_call.1} parent=0
    #allocation2 [shape = 'u8[1024]{0}', space=vmem, size = 0x400, scoped, tag = 'output window, operand 0, single buffered']
    #allocation3 [shape = 's32[1]{0}', space=sflag, size = 0x4, scoped, tag = 'scoped memory for tpu_custom_call.1']
    %7 = vsyncpa [#allocation3], 0
    // Predicated region
    $region2: #{tpu_custom_call.1} parent=1 // pred_check
      _
    $region3: #{tpu_custom_call.1} parent=1 // pred_check_branch
      %9 = sbr.rel (0) target = $region5
    $region4: #{tpu_custom_call.1} parent=1 // pred_region
      _
    $region5: #{tpu_custom_call.1} parent=1 // pred_fallthru
      _
    // Predicated region
    $region6: #{tpu_custom_call.1} parent=1 // pred_check
      _
    $region7: #{tpu_custom_call.1} parent=1 // pred_check_branch
      %11 = sbr.rel (0) target = $region9
    $region8: #{tpu_custom_call.1} parent=1 // pred_region
      _
    $region9: #{tpu_custom_call.1} parent=1 // pred_fallthru
      _
    %v12 = vld [vmem:[%s0] sm:$0xff]
    %v13 = vld [vmem:[%s0 + $0x8] sm:$0xff]
    %v14 = vld [vmem:[%s0 + $0x10] sm:$0xff]
    %v15 = vld [vmem:[%s0 + $0x18] sm:$0xff]
    %v16 = vld [vmem:[%s1] sm:$0xff]
    %v17 = vld [vmem:[%s1 + $0x8] sm:$0xff]
    %v18 = vld [vmem:[%s1 + $0x10] sm:$0xff]
    %v19 = vld [vmem:[%s1 + $0x18] sm:$0xff]
    %v20 = vlaneseq
    %v21 = vand.u32 %v20, 127
    %vm22 = vcmp.eq.s32.totalorder %v21, 0
    %v23 = vsel %vm22, 1, 0
    %v24 = vcvt.s32.f32 %v23
    %vm25 = vcmask 261120
    %v27 = vsel %vm25, %v24, 0
    %29 = vmatpush.msra.mxu0 0.0
    %30 = vmatpush.msra.mxu0 0.0
    %31 = vmatpush.msra.mxu0 0.0
    %32 = vmatpush.msra.mxu0 0.0
    %33 = vmatpush.msra.mxu0 0.0
    %34 = vmatpush.msra.mxu0 0.0
    %35 = vmatpush.msra.mxu0 0.0
    %36 = vmatpush.msra.mxu0 0.0
    %37 = vmatpush.msra.mxu0 0.0
    %38 = vmatpush.msra.mxu0 0.0
    %39 = vmatpush.msra.mxu0 0.0
    %40 = vmatpush.msra.mxu0 0.0
    %41 = vmatpush.msra.mxu0 %v15
    %42 = vmatpush.msra.mxu0 %v14
    %43 = vmatpush.msra.mxu0 %v13
    %44 = vmatpush.msra.mxu0 %v12
    %45 = vmatmul.f32.gmra.mxu0 %v27
    %v46 = vpop.f32.mrf.mxu0
    %v47 = vadd.f32 0.0, %v46
    %48 = vdwg.mxu0
    %v49 = vmul.f32 %v47, %v47
    %v51 = vsel %vm25, %v47, 0
    %53 = vmatpush.msra.mxu0 0.0
    %54 = vmatpush.msra.mxu0 0.0
    %55 = vmatpush.msra.mxu0 0.0
    %56 = vmatpush.msra.mxu0 0.0
    %57 = vmatpush.msra.mxu0 0.0
    %58 = vmatpush.msra.mxu0 0.0
    %59 = vmatpush.msra.mxu0 0.0
    %60 = vmatpush.msra.mxu0 0.0
    %61 = vmatpush.msra.mxu0 0.0
    %62 = vmatpush.msra.mxu0 0.0
    %63 = vmatpush.msra.mxu0 0.0
    %64 = vmatpush.msra.mxu0 0.0
    %65 = vmatpush.msra.mxu0 %v15
    %66 = vmatpush.msra.mxu0 %v14
    %67 = vmatpush.msra.mxu0 %v13
    %68 = vmatpush.msra.mxu0 %v12
    %69 = vmatmul.f32.gmra.mxu0 %v51
    %v70 = vpop.f32.mrf.mxu0
    %v71 = vadd.f32 0.0, %v70
    %72 = vdwg.mxu0
    %v73 = vmul.f32 %v71, %v71
    %v75 = vrot.slane %v73, 7
    %vm77 = vcmask 1040384
    %v78 = vsel %vm77, %v49, %v75
    %v80 = vsel %vm25, %v78, 0
    %82 = vmatpush.msra.mxu0 0.0
    %83 = vmatpush.msra.mxu0 0.0
    %84 = vmatpush.msra.mxu0 0.0
    %85 = vmatpush.msra.mxu0 0.0
    %86 = vmatpush.msra.mxu0 0.0
    %87 = vmatpush.msra.mxu0 0.0
    %88 = vmatpush.msra.mxu0 0.0
    %89 = vmatpush.msra.mxu0 0.0
    %90 = vmatpush.msra.mxu0 0.0
    %91 = vmatpush.msra.mxu0 0.0
    %92 = vmatpush.msra.mxu0 0.0
    %93 = vmatpush.msra.mxu0 0.0
    %94 = vmatpush.msra.mxu0 %v19
    %95 = vmatpush.msra.mxu0 %v18
    %96 = vmatpush.msra.mxu0 %v17
    %97 = vmatpush.msra.mxu0 %v16
    %98 = vmatmul.f32.gmra.mxu0 %v80
    %v99 = vpop.f32.mrf.mxu0
    %v100 = vadd.f32 0.0, %v99
    %101 = vdwg.mxu0
    %vm102 = vcmask 25600
    %103 = vst.msk [vmem:[#allocation2] sm:$0x3] %vm102, %v100
    // Predicated region
    $region10: #{tpu_custom_call.1} parent=1 // pred_check
      _
    $region11: #{tpu_custom_call.1} parent=1 // pred_check_branch
      %105 = sbr.rel (0) target = $region13
    $region12: #{tpu_custom_call.1} parent=1 // pred_region
      %107 = vsyncadd [#allocation3], 0
      %s109 = sshll.u32 [#allocation2], 4
      %s110 = int_to_ptr.vmem [resolvable:$true] %s109
      %s111 = sshll.u32 %s2, 4
      %s112 = int_to_ptr.hbm [resolvable:$true] %s111
      %114 = dma.vmem_to_hbm [thread:$0]  %s110, 32, %s112, [#allocation3]
    $region13: #{tpu_custom_call.1} parent=1 // pred_fallthru
      _
    // Predicated region
    $region14: #{tpu_custom_call.1} parent=1 // pred_check
      _
    $region15: #{tpu_custom_call.1} parent=1 // pred_check_branch
      %116 = sbr.rel (0) target = $region17
    $region16: #{tpu_custom_call.1} parent=1 // pred_region
      %118 = dma.done [#allocation3], 32
    $region17: #{tpu_custom_call.1} parent=1 // pred_fallthru
      _
    %119 = vsyncpa [#allocation3], 1

</llo_original>
